<compile_context>
chip_gen: v7x
topology: tpu7x:2x2x1
jax: 0.10.0
libtpu: 0.0.40
codegen_flags: <defaults>
</compile_context>

<pallas_src>
import functools

import jax
import jax.numpy as jnp
from jax.experimental import pallas as pl
from jax.experimental.pallas import tpu as pltpu

_LANE = 128      # lane width: pad feature dims to this
_SUBLANE = 8     # sublane width: pad batch dim to this
_MAX_BATCH_TILE = 256
_FUSED_VMEM_BUDGET = 20 * 1024 * 1024  # conservative (v7x scoped VMEM = 32 MiB)


def _round_up(x, m):
    return ((x + m - 1) // m) * m


def _fused_mlp_kernel(*refs, activations):
    """Fused MLP: refs = (x, w0, b0, w1, b1, ..., out).

    x:  (tm, F0p)   wi: (Fip, F(i+1)p)   bi: (1, F(i+1)p)   out: (tm, FLp)
    All feature dims pre-padded to multiples of 128 with zeros; padded lanes
    stay zero through every layer (zero weight rows / zero bias, Mish(0)=0).
    """
    n_layers = len(activations)
    x_ref = refs[0]
    o_ref = refs[1 + 2 * n_layers]

    h = x_ref[...].astype(jnp.float32)
    for i in range(n_layers):
        w = refs[1 + 2 * i][...]
        b = refs[2 + 2 * i][...]
        y = jnp.dot(h, w, preferred_element_type=jnp.float32)
        y = y + b.astype(jnp.float32)
        act = activations[i]
        if act == "mish":
            # Mish(x) = x * tanh(softplus(x)); EUP transcendentals, f32.
            y = y * jnp.tanh(jax.nn.softplus(y))
        elif act == "none":
            pass
        else:
            raise ValueError(f"unsupported activation {act}")
        h = y
    o_ref[...] = h.astype(o_ref.dtype)


def mlp_forward(x, params, hid_trans="mish", out_trans=False):
    """Equivalent of MLP(features=..., hid_trans='mish', out_trans=False).forward.

    x: (B, F0) f32;  params: list of (W (Fin, Fout), b (Fout,)) f32.
    """
    n_layers = len(params)
    activations = []
    for i in range(n_layers):
        is_last = i == n_layers - 1
        trans = out_trans if is_last else hid_trans
        activations.append(trans if trans else "none")
    activations = tuple(activations)

    B, F0 = x.shape
    feats = [F0] + [w.shape[1] for (w, _) in params]
    feats_pad = [_round_up(f, _LANE) for f in feats]
    max_feat_pad = max(feats_pad)

    # Batch tiling: one lane-dense tile for small batches, 256-row tiles
    # (pipelined + megacore-parallel) for large ones.
    if B <= _MAX_BATCH_TILE:
        tm = _round_up(B, _SUBLANE)
        b_pad = tm
    else:
        tm = _MAX_BATCH_TILE
        b_pad = _round_up(B, tm)
    grid = (b_pad // tm,)

    # VMEM budget check for the fused (weights-resident) strategy.
    weight_bytes = sum(
        feats_pad[i] * feats_pad[i + 1] * 4 + feats_pad[i + 1] * 4
        for i in range(n_layers)
    )
    act_bytes = 2 * tm * max_feat_pad * 4  # x tile + out tile (double-buffered)
    if weight_bytes + 4 * act_bytes > _FUSED_VMEM_BUDGET:
        # TODO(synk): for large MLPs fall back to a per-layer (M,N,K)-tiled
        # accumulator pipeline instead of the fused VMEM-resident kernel.
        raise NotImplementedError("MLP too large for fused VMEM-resident kernel")

    # Zero-pad input, weights and biases to lane/sublane-aligned shapes.
    x_pad = jnp.zeros((b_pad, feats_pad[0]), x.dtype).at[:B, :F0].set(x)

    flat_inputs = [x_pad]
    in_specs = [pl.BlockSpec((tm, feats_pad[0]), lambda i: (i, 0))]
    for li, (w, b) in enumerate(params):
        k, n = w.shape
        kp, np_ = feats_pad[li], feats_pad[li + 1]
        w_p = jnp.zeros((kp, np_), w.dtype).at[:k, :n].set(w)
        b_p = jnp.zeros((1, np_), b.dtype).at[0, :n].set(b)
        flat_inputs.extend([w_p, b_p])
        # Constant index_map -> weights/bias DMA'd once, resident across tiles.
        in_specs.append(pl.BlockSpec((kp, np_), lambda i: (0, 0)))
        in_specs.append(pl.BlockSpec((1, np_), lambda i: (0, 0)))

    out_spec = pl.BlockSpec((tm, feats_pad[-1]), lambda i: (i, 0))

    kernel = functools.partial(_fused_mlp_kernel, activations=activations)
    out_pad = pl.pallas_call(
        kernel,
        out_shape=jax.ShapeDtypeStruct((b_pad, feats_pad[-1]), x.dtype),
        grid_spec=pl.GridSpec(
            grid=grid,
            in_specs=in_specs,
            out_specs=out_spec,
        ),
        compiler_params=pltpu.CompilerParams(
            dimension_semantics=("parallel",),
        ),
    )(*flat_inputs)

    return out_pad[:B, : feats[-1]]


def init_mlp_params(key, features):
    """PyTorch nn.Linear-style init: U(-1/sqrt(fan_in), 1/sqrt(fan_in))."""
    params = []
    for i in range(1, len(features)):
        fan_in, fan_out = features[i - 1], features[i]
        key, kw, kb = jax.random.split(key, 3)
        bound = 1.0 / (fan_in ** 0.5)
        # stored as (in, out) == transposed PyTorch (out, in) weight
        w = jax.random.uniform(kw, (fan_in, fan_out), jnp.float32, -bound, bound)
        b = jax.random.uniform(kb, (fan_out,), jnp.float32, -bound, bound)
        params.append((w, b))
    return params


def mlp_reference(x, params, hid_trans="mish", out_trans=False):
    """Pure-JAX reference for sanity checking."""
    n_layers = len(params)
    h = x
    for i, (w, b) in enumerate(params):
        is_last = i == n_layers - 1
        y = h @ w + b
        trans = out_trans if is_last else hid_trans
        if trans == "mish":
            y = y * jnp.tanh(jax.nn.softplus(y))
        h = y
    return h


if __name__ == "__main__":
    key = jax.random.PRNGKey(0)
    # Small MLP: 3 Linear layers, Mish on the two hidden layers, no output act.
    features = [32, 64, 48, 16]
    batch = 8

    key, kx = jax.random.split(key)
    x = jax.random.normal(kx, (batch, features[0]), jnp.float32)
    params = init_mlp_params(key, features)

    out = mlp_forward(x, params)
    out = jax.block_until_ready(out)
    ref = mlp_reference(x, params)
    assert out.shape == (batch, features[-1])
    assert jnp.allclose(out, ref, atol=1e-4, rtol=1e-4), "mismatch vs reference"

    # Larger batch exercises the batch-tiled (grid > 1) + padding path.
    key, kx2 = jax.random.split(key)
    x_big = jax.random.normal(kx2, (300, features[0]), jnp.float32)
    out_big = jax.block_until_ready(mlp_forward(x_big, params))
    ref_big = mlp_reference(x_big, params)
    assert out_big.shape == (300, features[-1])
    assert jnp.allclose(out_big, ref_big, atol=1e-4, rtol=1e-4), "mismatch (tiled)"

    print("KERNEL_OK")
</pallas_src>

<mosaic_0001>
module attributes {stable_mosaic.version = 11 : i64} {
  func.func @_fused_mlp_kernel(%arg0: i32, %arg1: memref<8x128xf32, #tpu.memory_space<vmem>>, %arg2: memref<128x128xf32, #tpu.memory_space<vmem>>, %arg3: memref<1x128xf32, #tpu.memory_space<vmem>>, %arg4: memref<128x128xf32, #tpu.memory_space<vmem>>, %arg5: memref<1x128xf32, #tpu.memory_space<vmem>>, %arg6: memref<128x128xf32, #tpu.memory_space<vmem>>, %arg7: memref<1x128xf32, #tpu.memory_space<vmem>>, %arg8: memref<8x128xf32, #tpu.memory_space<vmem>>) attributes {dimension_semantics = [#tpu.dimension_semantics<parallel>], iteration_bounds = array<i64: 1>, scalar_prefetch = 0 : i64, scratch_operands = 0 : i64, tpu.core_type = #tpu.core_type<tc>, window_params = [{transform_indices = @transform_0, window_bounds = array<i64: 8, 128>}, {pipeline_mode = #tpu.pipeline_mode<synchronous>, transform_indices = @transform_1, window_bounds = array<i64: 128, 128>}, {pipeline_mode = #tpu.pipeline_mode<synchronous>, transform_indices = @transform_2, window_bounds = array<i64: 1, 128>}, {pipeline_mode = #tpu.pipeline_mode<synchronous>, transform_indices = @transform_3, window_bounds = array<i64: 128, 128>}, {pipeline_mode = #tpu.pipeline_mode<synchronous>, transform_indices = @transform_4, window_bounds = array<i64: 1, 128>}, {pipeline_mode = #tpu.pipeline_mode<synchronous>, transform_indices = @transform_5, window_bounds = array<i64: 128, 128>}, {pipeline_mode = #tpu.pipeline_mode<synchronous>, transform_indices = @transform_6, window_bounds = array<i64: 1, 128>}, {transform_indices = @transform_7, window_bounds = array<i64: 8, 128>}]} {
    %c0 = arith.constant 0 : index
    %c0_0 = arith.constant 0 : index
    %0 = vector.load %arg1[%c0, %c0_0] : memref<8x128xf32, #tpu.memory_space<vmem>>, vector<8x128xf32>
    %c0_1 = arith.constant 0 : index
    %c0_2 = arith.constant 0 : index
    %1 = vector.load %arg2[%c0_1, %c0_2] : memref<128x128xf32, #tpu.memory_space<vmem>>, vector<128x128xf32>
    %c0_3 = arith.constant 0 : index
    %c0_4 = arith.constant 0 : index
    %2 = vector.load %arg3[%c0_3, %c0_4] : memref<1x128xf32, #tpu.memory_space<vmem>>, vector<1x128xf32>
    %cst = arith.constant dense<0.000000e+00> : vector<8x128xf32>
    %3 = tpu.matmul %0, %1, %cst {dimension_numbers = #tpu.dot_dimension_numbers<[1], [0], [0], [1], [0, 0, 1, 1], [], []>} : vector<8x128xf32>, vector<128x128xf32>, vector<8x128xf32> -> vector<8x128xf32>
    %4 = vector.broadcast %2 : vector<1x128xf32> to vector<8x128xf32>
    %5 = arith.addf %3, %4 : vector<8x128xf32>
    %cst_5 = arith.constant 0.000000e+00 : f32
    %6 = vector.broadcast %cst_5 : f32 to vector<8x128xf32>
    %7 = arith.maximumf %5, %6 : vector<8x128xf32>
    %8 = vector.broadcast %cst_5 : f32 to vector<8x128xf32>
    %9 = arith.subf %5, %8 : vector<8x128xf32>
    %10 = arith.cmpf one, %9, %9 : vector<8x128xf32>
    %11 = vector.broadcast %cst_5 : f32 to vector<8x128xf32>
    %12 = arith.addf %5, %11 : vector<8x128xf32>
    %13 = math.absf %9 : vector<8x128xf32>
    %cst_6 = arith.constant 0.000000e+00 : f32
    %14 = vector.broadcast %cst_6 : f32 to vector<8x128xf32>
    %15 = arith.subf %14, %13 : vector<8x128xf32>
    %16 = math.exp %15 : vector<8x128xf32>
    %17 = math.log1p %16 : vector<8x128xf32>
    %18 = arith.addf %7, %17 : vector<8x128xf32>
    %19 = arith.select %10, %12, %18 : vector<8x128xi1>, vector<8x128xf32>
    %20 = math.tanh %19 : vector<8x128xf32>
    %21 = arith.mulf %5, %20 : vector<8x128xf32>
    %c0_7 = arith.constant 0 : index
    %c0_8 = arith.constant 0 : index
    %22 = vector.load %arg4[%c0_7, %c0_8] : memref<128x128xf32, #tpu.memory_space<vmem>>, vector<128x128xf32>
    %c0_9 = arith.constant 0 : index
    %c0_10 = arith.constant 0 : index
    %23 = vector.load %arg5[%c0_9, %c0_10] : memref<1x128xf32, #tpu.memory_space<vmem>>, vector<1x128xf32>
    %cst_11 = arith.constant dense<0.000000e+00> : vector<8x128xf32>
    %24 = tpu.matmul %21, %22, %cst_11 {dimension_numbers = #tpu.dot_dimension_numbers<[1], [0], [0], [1], [0, 0, 1, 1], [], []>} : vector<8x128xf32>, vector<128x128xf32>, vector<8x128xf32> -> vector<8x128xf32>
    %25 = vector.broadcast %23 : vector<1x128xf32> to vector<8x128xf32>
    %26 = arith.addf %24, %25 : vector<8x128xf32>
    %cst_12 = arith.constant 0.000000e+00 : f32
    %27 = vector.broadcast %cst_12 : f32 to vector<8x128xf32>
    %28 = arith.maximumf %26, %27 : vector<8x128xf32>
    %29 = vector.broadcast %cst_12 : f32 to vector<8x128xf32>
    %30 = arith.subf %26, %29 : vector<8x128xf32>
    %31 = arith.cmpf one, %30, %30 : vector<8x128xf32>
    %32 = vector.broadcast %cst_12 : f32 to vector<8x128xf32>
    %33 = arith.addf %26, %32 : vector<8x128xf32>
    %34 = math.absf %30 : vector<8x128xf32>
    %cst_13 = arith.constant 0.000000e+00 : f32
    %35 = vector.broadcast %cst_13 : f32 to vector<8x128xf32>
    %36 = arith.subf %35, %34 : vector<8x128xf32>
    %37 = math.exp %36 : vector<8x128xf32>
    %38 = math.log1p %37 : vector<8x128xf32>
    %39 = arith.addf %28, %38 : vector<8x128xf32>
    %40 = arith.select %31, %33, %39 : vector<8x128xi1>, vector<8x128xf32>
    %41 = math.tanh %40 : vector<8x128xf32>
    %42 = arith.mulf %26, %41 : vector<8x128xf32>
    %c0_14 = arith.constant 0 : index
    %c0_15 = arith.constant 0 : index
    %43 = vector.load %arg6[%c0_14, %c0_15] : memref<128x128xf32, #tpu.memory_space<vmem>>, vector<128x128xf32>
    %c0_16 = arith.constant 0 : index
    %c0_17 = arith.constant 0 : index
    %44 = vector.load %arg7[%c0_16, %c0_17] : memref<1x128xf32, #tpu.memory_space<vmem>>, vector<1x128xf32>
    %cst_18 = arith.constant dense<0.000000e+00> : vector<8x128xf32>
    %45 = tpu.matmul %42, %43, %cst_18 {dimension_numbers = #tpu.dot_dimension_numbers<[1], [0], [0], [1], [0, 0, 1, 1], [], []>} : vector<8x128xf32>, vector<128x128xf32>, vector<8x128xf32> -> vector<8x128xf32>
    %46 = vector.broadcast %44 : vector<1x128xf32> to vector<8x128xf32>
    %47 = arith.addf %45, %46 : vector<8x128xf32>
    %c0_19 = arith.constant 0 : index
    %c0_20 = arith.constant 0 : index
    %48 = vector.load %arg8[%c0_19, %c0_20] : memref<8x128xf32, #tpu.memory_space<vmem>>, vector<8x128xf32>
    tpu.vector_store %arg8[%c0_19, %c0_20], %47 {strides = array<i32>} : memref<8x128xf32, #tpu.memory_space<vmem>>, vector<8x128xf32>,
    return
  }
  func.func @transform_0(%arg0: i32) -> (i32, i32) {
    %c0_i32 = arith.constant 0 : i32
    %c0_i32_0 = arith.constant 0 : i32
    return %arg0, %c0_i32 : i32, i32
  }
  func.func @transform_1(%arg0: i32) -> (i32, i32) {
    %c0_i32 = arith.constant 0 : i32
    %c0_i32_0 = arith.constant 0 : i32
    %c0_i32_1 = arith.constant 0 : i32
    return %c0_i32, %c0_i32_0 : i32, i32
  }
  func.func @transform_2(%arg0: i32) -> (i32, i32) {
    %c0_i32 = arith.constant 0 : i32
    %c0_i32_0 = arith.constant 0 : i32
    %c0_i32_1 = arith.constant 0 : i32
    return %c0_i32, %c0_i32_0 : i32, i32
  }
  func.func @transform_3(%arg0: i32) -> (i32, i32) {
    %c0_i32 = arith.constant 0 : i32
    %c0_i32_0 = arith.constant 0 : i32
    %c0_i32_1 = arith.constant 0 : i32
    return %c0_i32, %c0_i32_0 : i32, i32
  }
  func.func @transform_4(%arg0: i32) -> (i32, i32) {
    %c0_i32 = arith.constant 0 : i32
    %c0_i32_0 = arith.constant 0 : i32
    %c0_i32_1 = arith.constant 0 : i32
    return %c0_i32, %c0_i32_0 : i32, i32
  }
  func.func @transform_5(%arg0: i32) -> (i32, i32) {
    %c0_i32 = arith.constant 0 : i32
    %c0_i32_0 = arith.constant 0 : i32
    %c0_i32_1 = arith.constant 0 : i32
    return %c0_i32, %c0_i32_0 : i32, i32
  }
  func.func @transform_6(%arg0: i32) -> (i32, i32) {
    %c0_i32 = arith.constant 0 : i32
    %c0_i32_0 = arith.constant 0 : i32
    %c0_i32_1 = arith.constant 0 : i32
    return %c0_i32, %c0_i32_0 : i32, i32
  }
  func.func @transform_7(%arg0: i32) -> (i32, i32) {
    %c0_i32 = arith.constant 0 : i32
    %c0_i32_0 = arith.constant 0 : i32
    return %arg0, %c0_i32 : i32, i32
  }
}

</mosaic_0001>

<llo_original>
// kernel: tpu_custom_call.1
$region0: #{tpu_custom_call.1}
  #allocation0 [shape = 'u32[]', space=smem, size = 0x4, offset = 0x4, fixed_abs, tag = 'smem constant byte address 0x4 - core index']
  #allocation1 [shape = 'u32[144,128]{1,0:T(1,128)}', space=vmem, size = 0x12000, scoped, tag = 'internal scratch']
  %s0 = inlined_call_operand.hbm [shape: f32[8,128], index: 0, kind: input, shape index: {}]
  %s1 = inlined_call_operand.hbm [shape: f32[128,128], index: 1, kind: input, shape index: {}]
  %s2 = inlined_call_operand.vmem [shape: f32[1,128], index: 2, kind: input, shape index: {}]
  %s3 = inlined_call_operand.hbm [shape: f32[128,128], index: 3, kind: input, shape index: {}]
  %s4 = inlined_call_operand.vmem [shape: f32[1,128], index: 4, kind: input, shape index: {}]
  %s5 = inlined_call_operand.hbm [shape: f32[128,128], index: 5, kind: input, shape index: {}]
  %s6 = inlined_call_operand.vmem [shape: f32[1,128], index: 6, kind: input, shape index: {}]
  %s7 = inlined_call_operand.hbm [shape: f32[8,128], index: 7, kind: output, shape index: {}]
  %s8 = sld [smem:[#allocation0]]
  $region54: #{tpu_custom_call.1} parent=0
    _
  %s10 = ssub.s32 1, %s8
  %s11 = scalar_select 0, %s10, %s8
  $region1: #{tpu_custom_call.1} parent=0
    #allocation2 [shape = 'u8[4096]{0}', space=vmem, size = 0x1000, scoped, tag = 'input window, operand 0, single buffered']
    #allocation3 [shape = 's32[1]{0}', space=sflag, size = 0x4, scoped, tag = 'scoped memory for tpu_custom_call.1']
    #allocation4 [shape = 's32[1]{0}', space=sflag, size = 0x4, scoped, tag = 'scoped memory for tpu_custom_call.1']
    #allocation5 [shape = 'u8[65536]{0}', space=vmem, size = 0x10000, scoped, tag = 'input window, operand 1, single buffered']
    #allocation6 [shape = 's32[1]{0}', space=sflag, size = 0x4, scoped, tag = 'scoped memory for tpu_custom_call.1']
    #allocation7 [shape = 'u8[65536]{0}', space=vmem, size = 0x10000, scoped, tag = 'input window, operand 3, single buffered']
    #allocation8 [shape = 'u8[65536]{0}', space=vmem, size = 0x10000, scoped, tag = 'input window, operand 5, single buffered']
    #allocation9 [shape = 's32[1]{0}', space=sflag, size = 0x4, scoped, tag = 'scoped memory for tpu_custom_call.1']
    #allocation10 [shape = 'u8[4096]{0}', space=vmem, size = 0x1000, scoped, tag = 'output window, operand 0, single buffered']
    %12 = vsyncpa [#allocation3], 0
    %13 = vsyncpa [#allocation6], 0
    %14 = vsyncpa [#allocation9], 0
    %15 = vsyncpa [#allocation4], 0
    // Predicated region
    $region2: #{tpu_custom_call.1} parent=1 // pred_check
      _
    $region3: #{tpu_custom_call.1} parent=1 // pred_check_branch
      %17 = sbr.rel (0) target = $region5
    $region4: #{tpu_custom_call.1} parent=1 // pred_region
      %s19 = ssub.s32 128, 128
      %20 = vsyncadd [#allocation3], %s19
      %s22 = sshll.u32 [#allocation2], 4
      %s23 = int_to_ptr.vmem [resolvable:$true] %s22
      %25 = dma.hbm_to_vmem [thread:$0]  %s0, 128, %s23, [#allocation3]
    $region5: #{tpu_custom_call.1} parent=1 // pred_fallthru
      _
    // Predicated region
    $region6: #{tpu_custom_call.1} parent=1 // pred_check
      _
    $region7: #{tpu_custom_call.1} parent=1 // pred_check_branch
      %27 = sbr.rel (0) target = $region9
    $region8: #{tpu_custom_call.1} parent=1 // pred_region
      %s29 = ssub.s32 2048, 2048
      %30 = vsyncadd [#allocation6], %s29
      %s31 = sshll.u32 [#allocation5], 4
      %s32 = int_to_ptr.vmem [resolvable:$true] %s31
      %37 = dma.hbm_to_vmem [thread:$0]  %s1, 2048, %s32, [#allocation6], 128, 128, 8
    $region9: #{tpu_custom_call.1} parent=1 // pred_fallthru
      _
    // Predicated region
    $region10: #{tpu_custom_call.1} parent=1 // pred_check
      _
    $region11: #{tpu_custom_call.1} parent=1 // pred_check_branch
      %39 = sbr.rel (0) target = $region13
    $region12: #{tpu_custom_call.1} parent=1 // pred_region
      _
    $region13: #{tpu_custom_call.1} parent=1 // pred_fallthru
      _
    // Predicated region
    $region14: #{tpu_custom_call.1} parent=1 // pred_check
      _
    $region15: #{tpu_custom_call.1} parent=1 // pred_check_branch
      %41 = sbr.rel (0) target = $region17
    $region16: #{tpu_custom_call.1} parent=1 // pred_region
      %s43 = ssub.s32 2048, 2048
      %44 = vsyncadd [#allocation6], %s43
      %s45 = sshll.u32 [#allocation7], 4
      %s46 = int_to_ptr.vmem [resolvable:$true] %s45
      %51 = dma.hbm_to_vmem [thread:$0]  %s3, 2048, %s46, [#allocation6], 128, 128, 8
    $region17: #{tpu_custom_call.1} parent=1 // pred_fallthru
      _
    // Predicated region
    $region18: #{tpu_custom_call.1} parent=1 // pred_check
      _
    $region19: #{tpu_custom_call.1} parent=1 // pred_check_branch
      %53 = sbr.rel (0) target = $region21
    $region20: #{tpu_custom_call.1} parent=1 // pred_region
      _
    $region21: #{tpu_custom_call.1} parent=1 // pred_fallthru
      _
    // Predicated region
    $region22: #{tpu_custom_call.1} parent=1 // pred_check
      _
    $region23: #{tpu_custom_call.1} parent=1 // pred_check_branch
      %55 = sbr.rel (0) target = $region25
    $region24: #{tpu_custom_call.1} parent=1 // pred_region
      %s57 = ssub.s32 2048, 2048
      %58 = vsyncadd [#allocation9], %s57
      %s59 = sshll.u32 [#allocation8], 4
      %s60 = int_to_ptr.vmem [resolvable:$true] %s59
      %65 = dma.hbm_to_vmem [thread:$0]  %s5, 2048, %s60, [#allocation9], 128, 128, 8
    $region25: #{tpu_custom_call.1} parent=1 // pred_fallthru
      _
    // Predicated region
    $region26: #{tpu_custom_call.1} parent=1 // pred_check
      _
    $region27: #{tpu_custom_call.1} parent=1 // pred_check_branch
      %67 = sbr.rel (0) target = $region29
    $region28: #{tpu_custom_call.1} parent=1 // pred_region
      _
    $region29: #{tpu_custom_call.1} parent=1 // pred_fallthru
      _
    // Predicated region
    $region30: #{tpu_custom_call.1} parent=1 // pred_check
      _
    $region31: #{tpu_custom_call.1} parent=1 // pred_check_branch
      %69 = sbr.rel (0) target = $region33
    $region32: #{tpu_custom_call.1} parent=1 // pred_region
      %70 = dma.done [#allocation3], 128
    $region33: #{tpu_custom_call.1} parent=1 // pred_fallthru
      _
    // Predicated region
    $region34: #{tpu_custom_call.1} parent=1 // pred_check
      _
    $region35: #{tpu_custom_call.1} parent=1 // pred_check_branch
      %72 = sbr.rel (0) target = $region37
    $region36: #{tpu_custom_call.1} parent=1 // pred_region
      %73 = dma.done [#allocation6], 2048
    $region37: #{tpu_custom_call.1} parent=1 // pred_fallthru
      _
    // Predicated region
    $region38: #{tpu_custom_call.1} parent=1 // pred_check
      _
    $region39: #{tpu_custom_call.1} parent=1 // pred_check_branch
      %75 = sbr.rel (0) target = $region41
    $region40: #{tpu_custom_call.1} parent=1 // pred_region
      %76 = dma.done [#allocation6], 2048
    $region41: #{tpu_custom_call.1} parent=1 // pred_fallthru
      _
    // Predicated region
    $region42: #{tpu_custom_call.1} parent=1 // pred_check
      _
    $region43: #{tpu_custom_call.1} parent=1 // pred_check_branch
      %78 = sbr.rel (0) target = $region45
    $region44: #{tpu_custom_call.1} parent=1 // pred_region
      %79 = dma.done [#allocation9], 2048
    $region45: #{tpu_custom_call.1} parent=1 // pred_fallthru
      _
    %v80 = vld [vmem:[#allocation2] sm:$0xff]
    %v81 = vld [vmem:[#allocation5] sm:$0xff]
    %v82 = vld [vmem:[#allocation5 + $0x8] sm:$0xff]
    %v83 = vld [vmem:[#allocation5 + $0x10] sm:$0xff]
    %v84 = vld [vmem:[#allocation5 + $0x18] sm:$0xff]
    %v85 = vld [vmem:[#allocation5 + $0x20] sm:$0xff]
    %v86 = vld [vmem:[#allocation5 + $0x28] sm:$0xff]
    %v87 = vld [vmem:[#allocation5 + $0x30] sm:$0xff]
    %v88 = vld [vmem:[#allocation5 + $0x38] sm:$0xff]
    %v89 = vld [vmem:[#allocation5 + $0x40] sm:$0xff]
    %v90 = vld [vmem:[#allocation5 + $0x48] sm:$0xff]
    %v91 = vld [vmem:[#allocation5 + $0x50] sm:$0xff]
    %v92 = vld [vmem:[#allocation5 + $0x58] sm:$0xff]
    %v93 = vld [vmem:[#allocation5 + $0x60] sm:$0xff]
    %v94 = vld [vmem:[#allocation5 + $0x68] sm:$0xff]
    %v95 = vld [vmem:[#allocation5 + $0x70] sm:$0xff]
    %v96 = vld [vmem:[#allocation5 + $0x78] sm:$0xff]
    %v97 = vld [vmem:[%s2] sm:$0x1]
    %v99 = vlaneseq
    %v100 = vshrl.u32 %v99, 7
    %v101 = vsub.s32 0, %v100
    %v102 = vrot.slane %v97, %v101
    %104 = vmatprep.subr.mxu0 0.0
    %105 = vmatpush1.msra.mxu0 %v81
    %106 = vmatprep.subr.mxu0 0.0
    %107 = vmatpush1.msra.mxu0 %v82
    %108 = vmatprep.subr.mxu0 0.0
    %109 = vmatpush1.msra.mxu0 %v83
    %110 = vmatprep.subr.mxu0 0.0
    %111 = vmatpush1.msra.mxu0 %v84
    %112 = vmatprep.subr.mxu0 0.0
    %113 = vmatpush1.msra.mxu0 %v85
    %114 = vmatprep.subr.mxu0 0.0
    %115 = vmatpush1.msra.mxu0 %v86
    %116 = vmatprep.subr.mxu0 0.0
    %117 = vmatpush1.msra.mxu0 %v87
    %118 = vmatprep.subr.mxu0 0.0
    %119 = vmatpush1.msra.mxu0 %v88
    %120 = vmatprep.subr.mxu0 0.0
    %121 = vmatpush1.msra.mxu0 %v89
    %122 = vmatprep.subr.mxu0 0.0
    %123 = vmatpush1.msra.mxu0 %v90
    %124 = vmatprep.subr.mxu0 0.0
    %125 = vmatpush1.msra.mxu0 %v91
    %126 = vmatprep.subr.mxu0 0.0
    %127 = vmatpush1.msra.mxu0 %v92
    %128 = vmatprep.subr.mxu0 0.0
    %129 = vmatpush1.msra.mxu0 %v93
    %130 = vmatprep.subr.mxu0 0.0
    %131 = vmatpush1.msra.mxu0 %v94
    %132 = vmatprep.subr.mxu0 0.0
    %133 = vmatpush1.msra.mxu0 %v95
    %134 = vmatprep.subr.mxu0 0.0
    %135 = vmatpush1.msra.mxu0 %v96
    %136 = vmatprep.subr.mxu0 0.0
    %137 = vmatpush1.msra.mxu0 0.0
    %138 = vmatprep.subr.mxu0 0.0
    %139 = vmatpush1.msra.mxu0 0.0
    %140 = vmatprep.subr.mxu0 0.0
    %141 = vmatpush1.msra.mxu0 0.0
    %142 = vmatprep.subr.mxu0 0.0
    %143 = vmatpush1.msra.mxu0 0.0
    %144 = vmatprep.subr.mxu0 0.0
    %145 = vmatpush1.msra.mxu0 0.0
    %146 = vmatprep.subr.mxu0 0.0
    %147 = vmatpush1.msra.mxu0 0.0
    %148 = vmatprep.subr.mxu0 0.0
    %149 = vmatpush1.msra.mxu0 0.0
    %150 = vmatprep.subr.mxu0 0.0
    %151 = vmatpush1.msra.mxu0 0.0
    %152 = vmatprep.subr.mxu0 0.0
    %153 = vmatpush1.msra.mxu0 0.0
    %154 = vmatprep.subr.mxu0 0.0
    %155 = vmatpush1.msra.mxu0 0.0
    %156 = vmatprep.subr.mxu0 0.0
    %157 = vmatpush1.msra.mxu0 0.0
    %158 = vmatprep.subr.mxu0 0.0
    %159 = vmatpush1.msra.mxu0 0.0
    %160 = vmatprep.subr.mxu0 0.0
    %161 = vmatpush1.msra.mxu0 0.0
    %162 = vmatprep.subr.mxu0 0.0
    %163 = vmatpush1.msra.mxu0 0.0
    %164 = vmatprep.subr.mxu0 0.0
    %165 = vmatpush1.msra.mxu0 0.0
    %166 = vmatprep.subr.mxu0 0.0
    %167 = vmatpush1.msra.mxu0 0.0
    %168 = vmatprep.mubr.f32.mxu0 0.0
    %169 = vmatmul.mubr.f32.gmra.mrb[0].mxu0 %v80
    %v170 = vpop.f32.mrb[0].mxu0
    %v171 = vadd.f32 %v102, %v170
    %v172 = vpop.f32.mrb[0].mxu0
    %173 = vdwg.mxu0
    %v174 = vmax.f32 %v171, 0.0
    %vm175 = vcmp.ne.f32.partialorder %v171, %v171
    %v176 = vadd.f32 %v171, 0.0
    %v177 = vand.u32 2147483647, %v171
    %v178 = vsub.f32 0.0, %v177
    %v179 = vmul.f32 %v178, 1.442695
    %v180 = vpow.pop %v179
    %v181 = vadd.f32 %v180, 1.0
    %v182 = vlog2.pop %v181
    %v183 = vmul.f32 %v182, 0.6931472
    %v184 = vmul.f32 -0.5, %v180
    %v185 = vadd.f32 %v184, 1.0
    %v186 = vmul.f32 %v185, %v180
    %v187 = vand.u32 2147483647, %v180
    %vm188 = vcmp.lt.f32.partialorder %v187, 0.0004427343
    %v189 = vsel %vm188, %v186, %v183
    %v190 = vadd.f32 %v174, %v189
    %v191 = vsel %vm175, %v176, %v190
    %v192 = vtanh.pop %v191
    %v193 = vmul.f32 %v171, %v192
    %v194 = vld [vmem:[#allocation7] sm:$0xff]
    %v195 = vld [vmem:[#allocation7 + $0x8] sm:$0xff]
    %v196 = vld [vmem:[#allocation7 + $0x10] sm:$0xff]
    %v197 = vld [vmem:[#allocation7 + $0x18] sm:$0xff]
    %v198 = vld [vmem:[#allocation7 + $0x20] sm:$0xff]
    %v199 = vld [vmem:[#allocation7 + $0x28] sm:$0xff]
    %v200 = vld [vmem:[#allocation7 + $0x30] sm:$0xff]
    %v201 = vld [vmem:[#allocation7 + $0x38] sm:$0xff]
    %v202 = vld [vmem:[#allocation7 + $0x40] sm:$0xff]
    %v203 = vld [vmem:[#allocation7 + $0x48] sm:$0xff]
    %v204 = vld [vmem:[#allocation7 + $0x50] sm:$0xff]
    %v205 = vld [vmem:[#allocation7 + $0x58] sm:$0xff]
    %v206 = vld [vmem:[#allocation7 + $0x60] sm:$0xff]
    %v207 = vld [vmem:[#allocation7 + $0x68] sm:$0xff]
    %v208 = vld [vmem:[#allocation7 + $0x70] sm:$0xff]
    %v209 = vld [vmem:[#allocation7 + $0x78] sm:$0xff]
    %v210 = vld [vmem:[%s4] sm:$0x1]
    %v212 = vlaneseq
    %v213 = vshrl.u32 %v212, 7
    %v214 = vsub.s32 0, %v213
    %v215 = vrot.slane %v210, %v214
    %217 = vmatprep.subr.mxu0 0.0
    %218 = vmatpush1.msra.mxu0 %v194
    %219 = vmatprep.subr.mxu0 0.0
    %220 = vmatpush1.msra.mxu0 %v195
    %221 = vmatprep.subr.mxu0 0.0
    %222 = vmatpush1.msra.mxu0 %v196
    %223 = vmatprep.subr.mxu0 0.0
    %224 = vmatpush1.msra.mxu0 %v197
    %225 = vmatprep.subr.mxu0 0.0
    %226 = vmatpush1.msra.mxu0 %v198
    %227 = vmatprep.subr.mxu0 0.0
    %228 = vmatpush1.msra.mxu0 %v199
    %229 = vmatprep.subr.mxu0 0.0
    %230 = vmatpush1.msra.mxu0 %v200
    %231 = vmatprep.subr.mxu0 0.0
    %232 = vmatpush1.msra.mxu0 %v201
    %233 = vmatprep.subr.mxu0 0.0
    %234 = vmatpush1.msra.mxu0 %v202
    %235 = vmatprep.subr.mxu0 0.0
    %236 = vmatpush1.msra.mxu0 %v203
    %237 = vmatprep.subr.mxu0 0.0
    %238 = vmatpush1.msra.mxu0 %v204
    %239 = vmatprep.subr.mxu0 0.0
    %240 = vmatpush1.msra.mxu0 %v205
    %241 = vmatprep.subr.mxu0 0.0
    %242 = vmatpush1.msra.mxu0 %v206
    %243 = vmatprep.subr.mxu0 0.0
    %244 = vmatpush1.msra.mxu0 %v207
    %245 = vmatprep.subr.mxu0 0.0
    %246 = vmatpush1.msra.mxu0 %v208
    %247 = vmatprep.subr.mxu0 0.0
    %248 = vmatpush1.msra.mxu0 %v209
    %249 = vmatprep.subr.mxu0 0.0
    %250 = vmatpush1.msra.mxu0 0.0
    %251 = vmatprep.subr.mxu0 0.0
    %252 = vmatpush1.msra.mxu0 0.0
    %253 = vmatprep.subr.mxu0 0.0
    %254 = vmatpush1.msra.mxu0 0.0
    %255 = vmatprep.subr.mxu0 0.0
    %256 = vmatpush1.msra.mxu0 0.0
    %257 = vmatprep.subr.mxu0 0.0
    %258 = vmatpush1.msra.mxu0 0.0
    %259 = vmatprep.subr.mxu0 0.0
    %260 = vmatpush1.msra.mxu0 0.0
    %261 = vmatprep.subr.mxu0 0.0
    %262 = vmatpush1.msra.mxu0 0.0
    %263 = vmatprep.subr.mxu0 0.0
    %264 = vmatpush1.msra.mxu0 0.0
    %265 = vmatprep.subr.mxu0 0.0
    %266 = vmatpush1.msra.mxu0 0.0
    %267 = vmatprep.subr.mxu0 0.0
    %268 = vmatpush1.msra.mxu0 0.0
    %269 = vmatprep.subr.mxu0 0.0
    %270 = vmatpush1.msra.mxu0 0.0
    %271 = vmatprep.subr.mxu0 0.0
    %272 = vmatpush1.msra.mxu0 0.0
    %273 = vmatprep.subr.mxu0 0.0
    %274 = vmatpush1.msra.mxu0 0.0
    %275 = vmatprep.subr.mxu0 0.0
    %276 = vmatpush1.msra.mxu0 0.0
    %277 = vmatprep.subr.mxu0 0.0
    %278 = vmatpush1.msra.mxu0 0.0
    %279 = vmatprep.subr.mxu0 0.0
    %280 = vmatpush1.msra.mxu0 0.0
    %281 = vmatprep.mubr.f32.mxu0 0.0
    %282 = vmatmul.mubr.f32.gmra.mrb[0].mxu0 %v193
    %v283 = vpop.f32.mrb[0].mxu0
    %v284 = vadd.f32 %v215, %v283
    %v285 = vpop.f32.mrb[0].mxu0
    %286 = vdwg.mxu0
    %v287 = vmax.f32 %v284, 0.0
    %vm288 = vcmp.ne.f32.partialorder %v284, %v284
    %v289 = vadd.f32 %v284, 0.0
    %v290 = vand.u32 2147483647, %v284
    %v291 = vsub.f32 0.0, %v290
    %v292 = vmul.f32 %v291, 1.442695
    %v293 = vpow.pop %v292
    %v294 = vadd.f32 %v293, 1.0
    %v295 = vlog2.pop %v294
    %v296 = vmul.f32 %v295, 0.6931472
    %v297 = vmul.f32 -0.5, %v293
    %v298 = vadd.f32 %v297, 1.0
    %v299 = vmul.f32 %v298, %v293
    %v300 = vand.u32 2147483647, %v293
    %vm301 = vcmp.lt.f32.partialorder %v300, 0.0004427343
    %v302 = vsel %vm301, %v299, %v296
    %v303 = vadd.f32 %v287, %v302
    %v304 = vsel %vm288, %v289, %v303
    %v305 = vtanh.pop %v304
    %v306 = vmul.f32 %v284, %v305
    %v307 = vld [vmem:[#allocation8] sm:$0xff]
    %v308 = vld [vmem:[#allocation8 + $0x8] sm:$0xff]
    %v309 = vld [vmem:[#allocation8 + $0x10] sm:$0xff]
    %v310 = vld [vmem:[#allocation8 + $0x18] sm:$0xff]
    %v311 = vld [vmem:[#allocation8 + $0x20] sm:$0xff]
    %v312 = vld [vmem:[#allocation8 + $0x28] sm:$0xff]
    %v313 = vld [vmem:[#allocation8 + $0x30] sm:$0xff]
    %v314 = vld [vmem:[#allocation8 + $0x38] sm:$0xff]
    %v315 = vld [vmem:[#allocation8 + $0x40] sm:$0xff]
    %v316 = vld [vmem:[#allocation8 + $0x48] sm:$0xff]
    %v317 = vld [vmem:[#allocation8 + $0x50] sm:$0xff]
    %v318 = vld [vmem:[#allocation8 + $0x58] sm:$0xff]
    %v319 = vld [vmem:[#allocation8 + $0x60] sm:$0xff]
    %v320 = vld [vmem:[#allocation8 + $0x68] sm:$0xff]
    %v321 = vld [vmem:[#allocation8 + $0x70] sm:$0xff]
    %v322 = vld [vmem:[#allocation8 + $0x78] sm:$0xff]
    %v323 = vld [vmem:[%s6] sm:$0x1]
    %v325 = vlaneseq
    %v326 = vshrl.u32 %v325, 7
    %v327 = vsub.s32 0, %v326
    %v328 = vrot.slane %v323, %v327
    %330 = vmatprep.subr.mxu0 0.0
    %331 = vmatpush1.msra.mxu0 %v307
    %332 = vmatprep.subr.mxu0 0.0
    %333 = vmatpush1.msra.mxu0 %v308
    %334 = vmatprep.subr.mxu0 0.0
    %335 = vmatpush1.msra.mxu0 %v309
    %336 = vmatprep.subr.mxu0 0.0
    %337 = vmatpush1.msra.mxu0 %v310
    %338 = vmatprep.subr.mxu0 0.0
    %339 = vmatpush1.msra.mxu0 %v311
    %340 = vmatprep.subr.mxu0 0.0
    %341 = vmatpush1.msra.mxu0 %v312
    %342 = vmatprep.subr.mxu0 0.0
    %343 = vmatpush1.msra.mxu0 %v313
    %344 = vmatprep.subr.mxu0 0.0
    %345 = vmatpush1.msra.mxu0 %v314
    %346 = vmatprep.subr.mxu0 0.0
    %347 = vmatpush1.msra.mxu0 %v315
    %348 = vmatprep.subr.mxu0 0.0
    %349 = vmatpush1.msra.mxu0 %v316
    %350 = vmatprep.subr.mxu0 0.0
    %351 = vmatpush1.msra.mxu0 %v317
    %352 = vmatprep.subr.mxu0 0.0
    %353 = vmatpush1.msra.mxu0 %v318
    %354 = vmatprep.subr.mxu0 0.0
    %355 = vmatpush1.msra.mxu0 %v319
    %356 = vmatprep.subr.mxu0 0.0
    %357 = vmatpush1.msra.mxu0 %v320
    %358 = vmatprep.subr.mxu0 0.0
    %359 = vmatpush1.msra.mxu0 %v321
    %360 = vmatprep.subr.mxu0 0.0
    %361 = vmatpush1.msra.mxu0 %v322
    %362 = vmatprep.subr.mxu0 0.0
    %363 = vmatpush1.msra.mxu0 0.0
    %364 = vmatprep.subr.mxu0 0.0
    %365 = vmatpush1.msra.mxu0 0.0
    %366 = vmatprep.subr.mxu0 0.0
    %367 = vmatpush1.msra.mxu0 0.0
    %368 = vmatprep.subr.mxu0 0.0
    %369 = vmatpush1.msra.mxu0 0.0
    %370 = vmatprep.subr.mxu0 0.0
    %371 = vmatpush1.msra.mxu0 0.0
    %372 = vmatprep.subr.mxu0 0.0
    %373 = vmatpush1.msra.mxu0 0.0
    %374 = vmatprep.subr.mxu0 0.0
    %375 = vmatpush1.msra.mxu0 0.0
    %376 = vmatprep.subr.mxu0 0.0
    %377 = vmatpush1.msra.mxu0 0.0
    %378 = vmatprep.subr.mxu0 0.0
    %379 = vmatpush1.msra.mxu0 0.0
    %380 = vmatprep.subr.mxu0 0.0
    %381 = vmatpush1.msra.mxu0 0.0
    %382 = vmatprep.subr.mxu0 0.0
    %383 = vmatpush1.msra.mxu0 0.0
    %384 = vmatprep.subr.mxu0 0.0
    %385 = vmatpush1.msra.mxu0 0.0
    %386 = vmatprep.subr.mxu0 0.0
    %387 = vmatpush1.msra.mxu0 0.0
    %388 = vmatprep.subr.mxu0 0.0
    %389 = vmatpush1.msra.mxu0 0.0
    %390 = vmatprep.subr.mxu0 0.0
    %391 = vmatpush1.msra.mxu0 0.0
    %392 = vmatprep.subr.mxu0 0.0
    %393 = vmatpush1.msra.mxu0 0.0
    %394 = vmatprep.mubr.f32.mxu0 0.0
    %395 = vmatmul.mubr.f32.gmra.mrb[0].mxu0 %v306
    %v396 = vpop.f32.mrb[0].mxu0
    %v397 = vadd.f32 %v328, %v396
    %v398 = vpop.f32.mrb[0].mxu0
    %399 = vdwg.mxu0
    %400 = vst [vmem:[#allocation10] sm:$0xff] %v397
    // Predicated region
    $region46: #{tpu_custom_call.1} parent=1 // pred_check
      _
    $region47: #{tpu_custom_call.1} parent=1 // pred_check_branch
      %402 = sbr.rel (0) target = $region49
    $region48: #{tpu_custom_call.1} parent=1 // pred_region
      %s404 = ssub.s32 128, 128
      %405 = vsyncadd [#allocation4], %s404
      %s407 = sshll.u32 [#allocation10], 4
      %s408 = int_to_ptr.vmem [resolvable:$true] %s407
      %410 = dma.vmem_to_hbm [thread:$0]  %s408, 128, %s7, [#allocation4]
    $region49: #{tpu_custom_call.1} parent=1 // pred_fallthru
      _
    // Predicated region
    $region50: #{tpu_custom_call.1} parent=1 // pred_check
      _
    $region51: #{tpu_custom_call.1} parent=1 // pred_check_branch
      %412 = sbr.rel (0) target = $region53
    $region52: #{tpu_custom_call.1} parent=1 // pred_region
      %413 = dma.done [#allocation4], 128
    $region53: #{tpu_custom_call.1} parent=1 // pred_fallthru
      _
    %414 = vsyncpa [#allocation3], 1
    %415 = vsyncpa [#allocation6], 1
    %416 = vsyncpa [#allocation9], 1
    %417 = vsyncpa [#allocation4], 1

</llo_original>
